<compile_context>
chip_gen: v7x
topology: tpu7x:2x2x1
jax: 0.10.0
libtpu: 0.0.40
codegen_flags: <defaults>
</compile_context>

<pallas_src>
import jax
import jax.numpy as jnp
import numpy as np
from jax.experimental import pallas as pl
from jax.experimental.pallas import tpu as pltpu

NUM_TCR_TYPE = 2  # implied by `.repeat(1, 2)` in the PyTorch module


def gelu_tanh(x):
    # tanh-approximate GELU (BERT-style)
    return 0.5 * x * (1.0 + jnp.tanh(0.7978845608028654 * (x + 0.044715 * x * x * x)))


def tcr_head_kernel(ind_ref, lab_ref, enc_ref, w1_ref, b1_ref, wp_ref, bp_ref,
                    stats_ref):
    tb = enc_ref.shape[0]          # batch elements fused into this grid step (static)
    S = enc_ref.shape[1]

    w1 = w1_ref[...]               # (H, H) bf16 (block index constant -> fetched once)
    b1 = b1_ref[...]               # (1, H) f32
    wp0 = wp_ref[0]                # predict_linear scalars live in SMEM
    wp1 = wp_ref[1]
    bp0 = bp_ref[0]
    bp1 = bp_ref[1]

    s_nll = jnp.float32(0.0)
    s_corr = jnp.float32(0.0)
    s_valid = jnp.float32(0.0)

    # Static unroll; TB is kept small enough by _pick_tb's VMEM formula that the
    # simultaneously-live per-t temporaries stay within budget.
    for t in range(tb):
        ind_row = ind_ref[t].astype(jnp.float32)       # (1, S) lane-dense
        lab = lab_ref[t].astype(jnp.float32)           # (1, S) in {-1, 0, 1}

        # Column form built in-kernel (cheap XLU transpose of one resident row)
        # instead of DMA-ing a lane-width-1 (S,1) block from HBM.
        ind_col = jnp.transpose(ind_row, (1, 0))       # (S, 1)

        # mask[i, j] = (indicator[i] == indicator[j]); exact in bf16 ({0,1})
        mask = (ind_col == ind_row).astype(jnp.bfloat16)                 # (S, S)

        # enc streamed from HBM as f32; cast to bf16 here (VPU) for the MXU.
        enc = enc_ref[t].astype(jnp.bfloat16)                            # (S, H)
        summed = jnp.dot(mask, enc, preferred_element_type=jnp.float32)  # (S, H) f32

        # uniform_linear + activation (bf16 operands, f32 accumulate)
        h = jnp.dot(summed.astype(jnp.bfloat16), w1,
                    preferred_element_type=jnp.float32) + b1             # (S, H) f32
        h = gelu_tanh(h)

        # cls_states = tcr_states[:, 0, :]; logits = tcr_states @ cls_states
        # computed lane-dense as (1, S) = cls @ h^T (NT dot_general).
        cls = h[0:1, :]                                                   # (1, H)
        logit1 = jax.lax.dot_general(
            cls.astype(jnp.bfloat16), h.astype(jnp.bfloat16),
            dimension_numbers=(((1,), (1,)), ((), ())),
            preferred_element_type=jnp.float32)                           # (1, S)
        g = gelu_tanh(logit1)                                             # (1, S)

        # predict_linear: Linear(1 -> 2), scalar weights from SMEM
        ignore = (lab < 0.0).astype(jnp.float32)                          # (1, S)
        neg = -100.0 * ignore
        l0 = g * wp0 + bp0 + neg                                          # (1, S)
        l1 = g * wp1 + bp1 + neg                                          # (1, S)

        # per-token cross entropy (ignore_index = -1) + argmax correctness
        valid = 1.0 - ignore
        m = jnp.maximum(l0, l1)
        lse = m + jnp.log(jnp.exp(l0 - m) + jnp.exp(l1 - m))
        chosen = jnp.where(lab == 1.0, l1, l0)
        nll = (lse - chosen) * valid

        pred = jnp.where(l1 > l0, 1.0, 0.0)   # ties -> 0 (first index, like torch.argmax)
        correct = (pred == lab).astype(jnp.float32)

        s_nll = s_nll + jnp.sum(nll)
        s_corr = s_corr + jnp.sum(correct)
        s_valid = s_valid + jnp.sum(valid)

    # Pack the three per-step partial sums into one lane-dense (1, 128) store.
    lane = jax.lax.broadcasted_iota(jnp.int32, (1, 128), 1)
    stats_ref[0] = (jnp.where(lane == 0, s_nll, 0.0)
                    + jnp.where(lane == 1, s_corr, 0.0)
                    + jnp.where(lane == 2, s_valid, 0.0))


def _pick_tb(batch, seq, hidden, budget_bytes=36 * 1024 * 1024):
    """Batch elements fused per grid step.

    - amortizes the ~0.35 us per-grid-step overhead (also for moderate S),
    - capped so num_steps = batch // tb >= 2 (keeps both v7x TensorCores busy),
    - capped by a VMEM working-set estimate: double-buffered f32 enc blocks +
      per-element bf16 mask and f32 temporaries of the statically unrolled loop.
    """
    if batch <= 1:
        return 1

    def vmem_bytes(tb):
        enc_in = 2 * tb * seq * hidden * 4                    # double-buffered f32 enc blocks
        small_in = 2 * tb * 2 * seq * 4                       # indicator + label rows
        weights = 2 * (hidden * hidden * 2 + hidden * 4)      # W1 bf16 + b1 f32 (buffered)
        per_t = tb * (seq * seq * 2 + 3 * seq * hidden * 4)   # mask bf16 + enc_bf16/summed/h
        outs = 2 * 128 * 4                                    # per-step stats buffers
        return enc_in + small_in + weights + per_t + outs

    max_tb = batch // 2                                       # >= 2 grid steps (v7x megacore)
    best = 1
    for tb in range(1, max_tb + 1):
        if batch % tb == 0 and vmem_bytes(tb) <= budget_bytes and tb * seq <= 4096:
            best = tb
    return best


@jax.jit
def tcr_head_forward(encoded_states, indicator, tcr_label, w1, b1, wp, bp):
    """Returns (loss, correct, count) — the same triple as the PyTorch module."""
    B, S, H = encoded_states.shape
    TB = _pick_tb(B, S, H)
    num_steps = B // TB

    # Only cheap metadata-level reshapes / tiny casts here; encoded_states stays
    # f32 (no extra HBM pass), the bf16 cast happens inside the kernel.
    ind_row = indicator.reshape(B, 1, S).astype(jnp.int32)
    lab_row = tcr_label.reshape(B, 1, S).astype(jnp.int32)
    w1_bf16 = w1.astype(jnp.bfloat16)              # (H, H): tiny one-off cast
    b1_2d = b1.reshape(1, H).astype(jnp.float32)

    stats = pl.pallas_call(
        tcr_head_kernel,
        grid=(num_steps,),
        in_specs=[
            pl.BlockSpec((TB, 1, S), lambda s: (s, 0, 0)),        # indicator rows (int32)
            pl.BlockSpec((TB, 1, S), lambda s: (s, 0, 0)),        # labels rows (int32)
            pl.BlockSpec((TB, S, H), lambda s: (s, 0, 0)),        # encoded_states (f32)
            pl.BlockSpec((H, H), lambda s: (0, 0)),               # uniform_linear W (bf16, pre-T)
            pl.BlockSpec((1, H), lambda s: (0, 0)),               # uniform_linear b (f32)
            pl.BlockSpec(memory_space=pltpu.MemorySpace.SMEM),    # predict W (2,)
            pl.BlockSpec(memory_space=pltpu.MemorySpace.SMEM),    # predict b (2,)
        ],
        out_specs=pl.BlockSpec((1, 1, 128), lambda s: (s, 0, 0)), # per-step partial sums
        out_shape=jax.ShapeDtypeStruct((num_steps, 1, 128), jnp.float32),
        compiler_params=pltpu.CompilerParams(
            # independent per-step outputs -> megacore sharding of the batch axis
            dimension_semantics=("parallel",),
            # above the 32 MiB default; kept under v7x's 64 MiB physical VMEM
            # (raise to 64-96 MiB on v5e/v6e for very large S tiles).
            vmem_limit_bytes=48 * 1024 * 1024,
        ),
    )(ind_row, lab_row, encoded_states.astype(jnp.float32), w1_bf16, b1_2d,
      wp.astype(jnp.float32), bp.astype(jnp.float32))

    totals = jnp.sum(stats[:, 0, :3], axis=0)   # (3,) = [sum_nll, sum_correct, sum_valid]
    sum_nll, sum_corr, sum_valid = totals[0], totals[1], totals[2]

    loss = sum_nll / sum_valid                  # CrossEntropyLoss(ignore_index=-1), mean
    correct = sum_corr.astype(jnp.int32)        # torch.sum(predict.eq(label))
    count = sum_valid + 1e-6                    # torch.sum(1 - ignore) + 1e-6
    return loss, correct, count


def reference_forward(encoded_states, indicator, tcr_label, w1, b1, wp, bp):
    """Pure-JAX mirror of the PyTorch forward with matching bf16/f32 matmul numerics."""
    B, S, H = encoded_states.shape
    ind = indicator.astype(jnp.float32)
    x_mask = ind[:, None, :]                                       # [B, 1, S]
    y_mask = jnp.swapaxes(x_mask, -1, -2)                          # [B, S, 1]
    mask = (y_mask == x_mask).astype(jnp.bfloat16)                 # [B, S, S]
    enc_bf = encoded_states.astype(jnp.bfloat16)
    summed = jnp.einsum("bij,bjh->bih", mask, enc_bf,
                        preferred_element_type=jnp.float32)        # [B, S, H] f32

    h = gelu_tanh(jnp.einsum("bsh,hk->bsk", summed.astype(jnp.bfloat16),
                             w1.astype(jnp.bfloat16),
                             preferred_element_type=jnp.float32) + b1)
    cls = h[:, 0, :]                                               # [B, H]
    logit1 = jnp.einsum("bsh,bh->bs", h.astype(jnp.bfloat16), cls.astype(jnp.bfloat16),
                        preferred_element_type=jnp.float32)        # [B, S]
    g = gelu_tanh(logit1).reshape(-1)                              # [B*S]

    lab = tcr_label.reshape(-1).astype(jnp.float32)
    ignore = (lab < 0).astype(jnp.float32)
    count = jnp.sum(1.0 - ignore) + 1e-6

    logits = g[:, None] * wp[None, :] + bp[None, :]                # [B*S, 2]
    logits = logits + (-100.0 * ignore)[:, None]

    lse = jax.scipy.special.logsumexp(logits, axis=-1)
    lab_idx = jnp.clip(lab, 0, 1).astype(jnp.int32)
    chosen = jnp.take_along_axis(logits, lab_idx[:, None], axis=1)[:, 0]
    valid = 1.0 - ignore
    loss = jnp.sum((lse - chosen) * valid) / jnp.sum(valid)

    pred = jnp.argmax(logits, axis=-1)
    correct = jnp.sum(pred == lab.astype(jnp.int32)).astype(jnp.int32)
    return loss, correct, count


if __name__ == "__main__":
    B, S, H = 2, 8, 32

    key = jax.random.PRNGKey(0)
    k_enc, k_ind, k_lab, k_w1, k_b1, k_wp, k_bp = jax.random.split(key, 7)

    encoded_states = jax.random.normal(k_enc, (B, S, H), dtype=jnp.float32)
    indicator = jax.random.randint(k_ind, (B, S), 0, 3, dtype=jnp.int32)
    tcr_label = jax.random.randint(k_lab, (B, S), -1, 2, dtype=jnp.int32)  # {-1, 0, 1}

    # Deterministic synthetic parameters (PyTorch Linear-style uniform init).
    bound1 = 1.0 / np.sqrt(H)
    w1_torch = jax.random.uniform(k_w1, (H, H), minval=-bound1, maxval=bound1)  # [out, in]
    b1 = jax.random.uniform(k_b1, (H,), minval=-bound1, maxval=bound1)
    w1 = w1_torch.T  # kernel computes x @ w1, matching torch's x @ W.T

    wp_torch = jax.random.uniform(k_wp, (NUM_TCR_TYPE, 1), minval=-1.0, maxval=1.0)  # [out, in=1]
    bp = jax.random.uniform(k_bp, (NUM_TCR_TYPE,), minval=-1.0, maxval=1.0)
    wp = wp_torch[:, 0]  # (2,)

    loss, correct, count = tcr_head_forward(
        encoded_states, indicator, tcr_label, w1, b1, wp, bp)
    jax.block_until_ready((loss, correct, count))

    ref_loss, ref_correct, ref_count = reference_forward(
        encoded_states, indicator, tcr_label, w1, b1, wp, bp)

    np.testing.assert_allclose(np.asarray(loss), np.asarray(ref_loss), rtol=1e-3, atol=1e-3)
    np.testing.assert_allclose(np.asarray(count), np.asarray(ref_count), rtol=1e-5, atol=1e-5)
    assert int(correct) == int(ref_correct), (int(correct), int(ref_correct))

    print("KERNEL_OK")
</pallas_src>

<mosaic_0001>
module attributes {stable_mosaic.version = 11 : i64} {
  func.func @tcr_head_kernel(%arg0: i32, %arg1: memref<1x1x8xi32, #tpu.memory_space<vmem>>, %arg2: memref<1x1x8xi32, #tpu.memory_space<vmem>>, %arg3: memref<1x8x32xf32, #tpu.memory_space<vmem>>, %arg4: memref<32x32xbf16, #tpu.memory_space<vmem>>, %arg5: memref<1x32xf32, #tpu.memory_space<vmem>>, %arg6: memref<2xf32, #tpu.memory_space<smem>>, %arg7: memref<2xf32, #tpu.memory_space<smem>>, %arg8: memref<1x1x128xf32, #tpu.memory_space<vmem>>) attributes {dimension_semantics = [#tpu.dimension_semantics<parallel>], iteration_bounds = array<i64: 2>, scalar_prefetch = 0 : i64, scratch_operands = 0 : i64, tpu.core_type = #tpu.core_type<tc>, window_params = [{transform_indices = @transform_0, window_bounds = array<i64: 1, 1, 8>}, {transform_indices = @transform_1, window_bounds = array<i64: 1, 1, 8>}, {transform_indices = @transform_2, window_bounds = array<i64: 1, 8, 32>}, {pipeline_mode = #tpu.pipeline_mode<synchronous>, transform_indices = @transform_3, window_bounds = array<i64: 32, 32>}, {pipeline_mode = #tpu.pipeline_mode<synchronous>, transform_indices = @transform_4, window_bounds = array<i64: 1, 32>}, {transform_indices = @transform_5, window_bounds = array<i64: 2>}, {transform_indices = @transform_6, window_bounds = array<i64: 2>}, {transform_indices = @transform_7, window_bounds = array<i64: 1, 1, 128>}]} {
    %c0 = arith.constant 0 : index
    %c0_0 = arith.constant 0 : index
    %0 = vector.load %arg4[%c0, %c0_0] : memref<32x32xbf16, #tpu.memory_space<vmem>>, vector<32x32xbf16>
    %c0_1 = arith.constant 0 : index
    %c0_2 = arith.constant 0 : index
    %1 = vector.load %arg5[%c0_1, %c0_2] : memref<1x32xf32, #tpu.memory_space<vmem>>, vector<1x32xf32>
    %c0_3 = arith.constant 0 : index
    %2 = memref.load %arg6[%c0_3] : memref<2xf32, #tpu.memory_space<smem>>
    %c1 = arith.constant 1 : index
    %3 = memref.load %arg6[%c1] : memref<2xf32, #tpu.memory_space<smem>>
    %c0_4 = arith.constant 0 : index
    %4 = memref.load %arg7[%c0_4] : memref<2xf32, #tpu.memory_space<smem>>
    %c1_5 = arith.constant 1 : index
    %5 = memref.load %arg7[%c1_5] : memref<2xf32, #tpu.memory_space<smem>>
    %c0_6 = arith.constant 0 : index
    %c0_7 = arith.constant 0 : index
    %c0_8 = arith.constant 0 : index
    %6 = vector.load %arg1[%c0_6, %c0_7, %c0_8] : memref<1x1x8xi32, #tpu.memory_space<vmem>>, vector<1x1x8xi32>
    %7 = vector.shape_cast %6 : vector<1x1x8xi32> to vector<1x8xi32>
    %8 = arith.sitofp %7 : vector<1x8xi32> to vector<1x8xf32>
    %c0_9 = arith.constant 0 : index
    %c0_10 = arith.constant 0 : index
    %c0_11 = arith.constant 0 : index
    %9 = vector.load %arg2[%c0_9, %c0_10, %c0_11] : memref<1x1x8xi32, #tpu.memory_space<vmem>>, vector<1x1x8xi32>
    %10 = vector.shape_cast %9 : vector<1x1x8xi32> to vector<1x8xi32>
    %11 = arith.sitofp %10 : vector<1x8xi32> to vector<1x8xf32>
    %12 = tpu.transpose %8, [1, 0] : vector<1x8xf32> -> vector<8x1xf32>
    %13 = vector.broadcast %12 : vector<8x1xf32> to vector<8x8xf32>
    %14 = vector.broadcast %8 : vector<1x8xf32> to vector<8x8xf32>
    %15 = arith.cmpf oeq, %13, %14 : vector<8x8xf32>
    %16 = arith.extui %15 : vector<8x8xi1> to vector<8x8xi32>
    %17 = arith.sitofp %16 : vector<8x8xi32> to vector<8x8xf32>
    %18 = arith.truncf %17 : vector<8x8xf32> to vector<8x8xbf16>
    %c0_12 = arith.constant 0 : index
    %c0_13 = arith.constant 0 : index
    %c0_14 = arith.constant 0 : index
    %19 = vector.load %arg3[%c0_12, %c0_13, %c0_14] : memref<1x8x32xf32, #tpu.memory_space<vmem>>, vector<1x8x32xf32>
    %20 = vector.shape_cast %19 : vector<1x8x32xf32> to vector<8x32xf32>
    %21 = arith.truncf %20 : vector<8x32xf32> to vector<8x32xbf16>
    %cst = arith.constant dense<0.000000e+00> : vector<8x32xf32>
    %22 = tpu.matmul %18, %21, %cst {dimension_numbers = #tpu.dot_dimension_numbers<[1], [0], [0], [1], [0, 0, 1, 1], [], []>} : vector<8x8xbf16>, vector<8x32xbf16>, vector<8x32xf32> -> vector<8x32xf32>
    %23 = arith.truncf %22 : vector<8x32xf32> to vector<8x32xbf16>
    %cst_15 = arith.constant dense<0.000000e+00> : vector<8x32xf32>
    %24 = tpu.matmul %23, %0, %cst_15 {dimension_numbers = #tpu.dot_dimension_numbers<[1], [0], [0], [1], [0, 0, 1, 1], [], []>} : vector<8x32xbf16>, vector<32x32xbf16>, vector<8x32xf32> -> vector<8x32xf32>
    %25 = vector.broadcast %1 : vector<1x32xf32> to vector<8x32xf32>
    %26 = arith.addf %24, %25 : vector<8x32xf32>
    %cst_16 = arith.constant 5.000000e-01 : f32
    %27 = vector.broadcast %cst_16 : f32 to vector<8x32xf32>
    %28 = arith.mulf %27, %26 : vector<8x32xf32>
    %cst_17 = arith.constant 4.471500e-02 : f32
    %29 = vector.broadcast %cst_17 : f32 to vector<8x32xf32>
    %30 = arith.mulf %29, %26 : vector<8x32xf32>
    %31 = arith.mulf %30, %26 : vector<8x32xf32>
    %32 = arith.mulf %31, %26 : vector<8x32xf32>
    %33 = arith.addf %26, %32 : vector<8x32xf32>
    %cst_18 = arith.constant 0.797884583 : f32
    %34 = vector.broadcast %cst_18 : f32 to vector<8x32xf32>
    %35 = arith.mulf %34, %33 : vector<8x32xf32>
    %36 = math.tanh %35 : vector<8x32xf32>
    %cst_19 = arith.constant 1.000000e+00 : f32
    %37 = vector.broadcast %cst_19 : f32 to vector<8x32xf32>
    %38 = arith.addf %37, %36 : vector<8x32xf32>
    %39 = arith.mulf %28, %38 : vector<8x32xf32>
    %40 = vector.extract_strided_slice %39 {offsets = [0, 0], sizes = [1, 32], strides = [1, 1]} : vector<8x32xf32> to vector<1x32xf32>
    %41 = arith.truncf %40 : vector<1x32xf32> to vector<1x32xbf16>
    %42 = arith.truncf %39 : vector<8x32xf32> to vector<8x32xbf16>
    %cst_20 = arith.constant dense<0.000000e+00> : vector<1x8xf32>
    %43 = tpu.matmul %41, %42, %cst_20 {dimension_numbers = #tpu.dot_dimension_numbers<[1], [1], [0], [0], [0, 0, 1, 0], [], []>} : vector<1x32xbf16>, vector<8x32xbf16>, vector<1x8xf32> -> vector<1x8xf32>
    %cst_21 = arith.constant 5.000000e-01 : f32
    %44 = vector.broadcast %cst_21 : f32 to vector<1x8xf32>
    %45 = arith.mulf %44, %43 : vector<1x8xf32>
    %cst_22 = arith.constant 4.471500e-02 : f32
    %46 = vector.broadcast %cst_22 : f32 to vector<1x8xf32>
    %47 = arith.mulf %46, %43 : vector<1x8xf32>
    %48 = arith.mulf %47, %43 : vector<1x8xf32>
    %49 = arith.mulf %48, %43 : vector<1x8xf32>
    %50 = arith.addf %43, %49 : vector<1x8xf32>
    %cst_23 = arith.constant 0.797884583 : f32
    %51 = vector.broadcast %cst_23 : f32 to vector<1x8xf32>
    %52 = arith.mulf %51, %50 : vector<1x8xf32>
    %53 = math.tanh %52 : vector<1x8xf32>
    %cst_24 = arith.constant 1.000000e+00 : f32
    %54 = vector.broadcast %cst_24 : f32 to vector<1x8xf32>
    %55 = arith.addf %54, %53 : vector<1x8xf32>
    %56 = arith.mulf %45, %55 : vector<1x8xf32>
    %cst_25 = arith.constant 0.000000e+00 : f32
    %57 = vector.broadcast %cst_25 : f32 to vector<1x8xf32>
    %58 = arith.cmpf olt, %11, %57 : vector<1x8xf32>
    %59 = arith.extui %58 : vector<1x8xi1> to vector<1x8xi32>
    %60 = arith.sitofp %59 : vector<1x8xi32> to vector<1x8xf32>
    %cst_26 = arith.constant -1.000000e+02 : f32
    %61 = vector.broadcast %cst_26 : f32 to vector<1x8xf32>
    %62 = arith.mulf %61, %60 : vector<1x8xf32>
    %63 = vector.broadcast %2 : f32 to vector<1x8xf32>
    %64 = arith.mulf %56, %63 : vector<1x8xf32>
    %65 = vector.broadcast %4 : f32 to vector<1x8xf32>
    %66 = arith.addf %64, %65 : vector<1x8xf32>
    %67 = arith.addf %66, %62 : vector<1x8xf32>
    %68 = vector.broadcast %3 : f32 to vector<1x8xf32>
    %69 = arith.mulf %56, %68 : vector<1x8xf32>
    %70 = vector.broadcast %5 : f32 to vector<1x8xf32>
    %71 = arith.addf %69, %70 : vector<1x8xf32>
    %72 = arith.addf %71, %62 : vector<1x8xf32>
    %cst_27 = arith.constant 1.000000e+00 : f32
    %73 = vector.broadcast %cst_27 : f32 to vector<1x8xf32>
    %74 = arith.subf %73, %60 : vector<1x8xf32>
    %75 = arith.maximumf %67, %72 : vector<1x8xf32>
    %76 = arith.subf %67, %75 : vector<1x8xf32>
    %77 = math.exp %76 : vector<1x8xf32>
    %78 = arith.subf %72, %75 : vector<1x8xf32>
    %79 = math.exp %78 : vector<1x8xf32>
    %80 = arith.addf %77, %79 : vector<1x8xf32>
    %81 = math.log %80 : vector<1x8xf32>
    %82 = arith.addf %75, %81 : vector<1x8xf32>
    %cst_28 = arith.constant 1.000000e+00 : f32
    %83 = vector.broadcast %cst_28 : f32 to vector<1x8xf32>
    %84 = arith.cmpf oeq, %11, %83 : vector<1x8xf32>
    %85 = arith.select %84, %72, %67 : vector<1x8xi1>, vector<1x8xf32>
    %86 = arith.subf %82, %85 : vector<1x8xf32>
    %87 = arith.mulf %86, %74 : vector<1x8xf32>
    %88 = arith.cmpf ogt, %72, %67 : vector<1x8xf32>
    %cst_29 = arith.constant 1.000000e+00 : f32
    %cst_30 = arith.constant 0.000000e+00 : f32
    %89 = vector.broadcast %cst_29 : f32 to vector<1x8xf32>
    %90 = vector.broadcast %cst_30 : f32 to vector<1x8xf32>
    %91 = arith.select %88, %89, %90 : vector<1x8xi1>, vector<1x8xf32>
    %92 = arith.cmpf oeq, %91, %11 : vector<1x8xf32>
    %93 = arith.extui %92 : vector<1x8xi1> to vector<1x8xi32>
    %94 = arith.sitofp %93 : vector<1x8xi32> to vector<1x8xf32>
    %95 = vector.shape_cast %87 : vector<1x8xf32> to vector<1x1x8xf32>
    %cst_31 = arith.constant dense<0.000000e+00> : vector<1xf32>
    %96 = vector.multi_reduction <add>, %95, %cst_31 [1, 2] : vector<1x1x8xf32> to vector<1xf32>
    %97 = vector.shape_cast %96 : vector<1xf32> to vector<1x1x1xf32>
    %98 = vector.extract %97[0, 0, 0] : f32 from vector<1x1x1xf32>
    %cst_32 = arith.constant 0.000000e+00 : f32
    %99 = arith.addf %cst_32, %98 : f32
    %100 = vector.shape_cast %94 : vector<1x8xf32> to vector<1x1x8xf32>
    %cst_33 = arith.constant dense<0.000000e+00> : vector<1xf32>
    %101 = vector.multi_reduction <add>, %100, %cst_33 [1, 2] : vector<1x1x8xf32> to vector<1xf32>
    %102 = vector.shape_cast %101 : vector<1xf32> to vector<1x1x1xf32>
    %103 = vector.extract %102[0, 0, 0] : f32 from vector<1x1x1xf32>
    %cst_34 = arith.constant 0.000000e+00 : f32
    %104 = arith.addf %cst_34, %103 : f32
    %105 = vector.shape_cast %74 : vector<1x8xf32> to vector<1x1x8xf32>
    %cst_35 = arith.constant dense<0.000000e+00> : vector<1xf32>
    %106 = vector.multi_reduction <add>, %105, %cst_35 [1, 2] : vector<1x1x8xf32> to vector<1xf32>
    %107 = vector.shape_cast %106 : vector<1xf32> to vector<1x1x1xf32>
    %108 = vector.extract %107[0, 0, 0] : f32 from vector<1x1x1xf32>
    %cst_36 = arith.constant 0.000000e+00 : f32
    %109 = arith.addf %cst_36, %108 : f32
    %110 = tpu.iota {dimensions = array<i32: 1>} : vector<1x128xi32>
    %c0_i32 = arith.constant 0 : i32
    %111 = vector.broadcast %c0_i32 : i32 to vector<1x128xi32>
    %112 = arith.cmpi eq, %110, %111 : vector<1x128xi32>
    %cst_37 = arith.constant 0.000000e+00 : f32
    %113 = vector.broadcast %99 : f32 to vector<1x128xf32>
    %114 = vector.broadcast %cst_37 : f32 to vector<1x128xf32>
    %115 = arith.select %112, %113, %114 : vector<1x128xi1>, vector<1x128xf32>
    %c1_i32 = arith.constant 1 : i32
    %116 = vector.broadcast %c1_i32 : i32 to vector<1x128xi32>
    %117 = arith.cmpi eq, %110, %116 : vector<1x128xi32>
    %cst_38 = arith.constant 0.000000e+00 : f32
    %118 = vector.broadcast %104 : f32 to vector<1x128xf32>
    %119 = vector.broadcast %cst_38 : f32 to vector<1x128xf32>
    %120 = arith.select %117, %118, %119 : vector<1x128xi1>, vector<1x128xf32>
    %121 = arith.addf %115, %120 : vector<1x128xf32>
    %c2_i32 = arith.constant 2 : i32
    %122 = vector.broadcast %c2_i32 : i32 to vector<1x128xi32>
    %123 = arith.cmpi eq, %110, %122 : vector<1x128xi32>
    %cst_39 = arith.constant 0.000000e+00 : f32
    %124 = vector.broadcast %109 : f32 to vector<1x128xf32>
    %125 = vector.broadcast %cst_39 : f32 to vector<1x128xf32>
    %126 = arith.select %123, %124, %125 : vector<1x128xi1>, vector<1x128xf32>
    %127 = arith.addf %121, %126 : vector<1x128xf32>
    %c0_40 = arith.constant 0 : index
    %c0_41 = arith.constant 0 : index
    %c0_42 = arith.constant 0 : index
    %128 = vector.load %arg8[%c0_40, %c0_41, %c0_42] : memref<1x1x128xf32, #tpu.memory_space<vmem>>, vector<1x1x128xf32>
    %129 = vector.shape_cast %128 : vector<1x1x128xf32> to vector<1x128xf32>
    %130 = vector.shape_cast %127 : vector<1x128xf32> to vector<1x1x128xf32>
    tpu.vector_store %arg8[%c0_40, %c0_41, %c0_42], %130 {strides = array<i32>} : memref<1x1x128xf32, #tpu.memory_space<vmem>>, vector<1x1x128xf32>,
    return
  }
  func.func @transform_0(%arg0: i32) -> (i32, i32, i32) {
    %c0_i32 = arith.constant 0 : i32
    %c0_i32_0 = arith.constant 0 : i32
    %c0_i32_1 = arith.constant 0 : i32
    return %arg0, %c0_i32, %c0_i32_0 : i32, i32, i32
  }
  func.func @transform_1(%arg0: i32) -> (i32, i32, i32) {
    %c0_i32 = arith.constant 0 : i32
    %c0_i32_0 = arith.constant 0 : i32
    %c0_i32_1 = arith.constant 0 : i32
    return %arg0, %c0_i32, %c0_i32_0 : i32, i32, i32
  }
  func.func @transform_2(%arg0: i32) -> (i32, i32, i32) {
    %c0_i32 = arith.constant 0 : i32
    %c0_i32_0 = arith.constant 0 : i32
    %c0_i32_1 = arith.constant 0 : i32
    return %arg0, %c0_i32, %c0_i32_0 : i32, i32, i32
  }
  func.func @transform_3(%arg0: i32) -> (i32, i32) {
    %c0_i32 = arith.constant 0 : i32
    %c0_i32_0 = arith.constant 0 : i32
    %c0_i32_1 = arith.constant 0 : i32
    return %c0_i32, %c0_i32_0 : i32, i32
  }
  func.func @transform_4(%arg0: i32) -> (i32, i32) {
    %c0_i32 = arith.constant 0 : i32
    %c0_i32_0 = arith.constant 0 : i32
    %c0_i32_1 = arith.constant 0 : i32
    return %c0_i32, %c0_i32_0 : i32, i32
  }
  func.func @transform_5(%arg0: i32) -> i32 {
    %c0_i32 = arith.constant 0 : i32
    %c0_i32_0 = arith.constant 0 : i32
    return %c0_i32 : i32
  }
  func.func @transform_6(%arg0: i32) -> i32 {
    %c0_i32 = arith.constant 0 : i32
    %c0_i32_0 = arith.constant 0 : i32
    return %c0_i32 : i32
  }
  func.func @transform_7(%arg0: i32) -> (i32, i32, i32) {
    %c0_i32 = arith.constant 0 : i32
    %c0_i32_0 = arith.constant 0 : i32
    %c0_i32_1 = arith.constant 0 : i32
    return %arg0, %c0_i32, %c0_i32_0 : i32, i32, i32
  }
}

</mosaic_0001>

<llo_original>
// kernel: tcr_head_forward.1
$region0: #{tcr_head_forward.1}
  #allocation0 [shape = 'u32[]', space=smem, size = 0x4, offset = 0x4, fixed_abs, tag = 'smem constant byte address 0x4 - core index']
  #allocation1 [shape = 'u32[144,128]{1,0:T(1,128)}', space=vmem, size = 0x12000, scoped, tag = 'internal scratch']
  %s0 = inlined_call_operand.vmem [shape: s32[2,1,8], index: 0, kind: input, shape index: {}]
  %s1 = inlined_call_operand.vmem [shape: s32[2,1,8], index: 1, kind: input, shape index: {}]
  %s2 = inlined_call_operand.vmem [shape: f32[2,8,32], index: 2, kind: input, shape index: {}]
  %s3 = inlined_call_operand.vmem [shape: bf16[32,32], index: 3, kind: input, shape index: {}]
  %s4 = inlined_call_operand.vmem [shape: f32[1,32], index: 4, kind: input, shape index: {}]
  %s5 = inlined_call_operand.vmem [shape: f32[2], index: 5, kind: input, shape index: {}]
  %s6 = inlined_call_operand.vmem [shape: f32[2], index: 6, kind: input, shape index: {}]
  %s7 = inlined_call_operand.vmem [shape: f32[2,1,128], index: 7, kind: output, shape index: {}]
  %s8 = sld [smem:[#allocation0]]
  $region69: #{tcr_head_forward.1} parent=0
    _
  %s10 = ssub.s32 1, %s8
  %s11 = scalar_select 0, %s10, %s8
  $region1: #{tcr_head_forward.1} parent=0
    #allocation2 [shape = 'u8[512]{0}', space=smem, size = 0x200, scoped, tag = 'input window, operand 5, single buffered']
    #allocation3 [shape = 's32[2]{0}', space=sflag, size = 0x8, scoped, tag = 'scoped memory for tcr_head_forward.1']
    #allocation4 [shape = 'u8[512]{0}', space=smem, size = 0x200, scoped, tag = 'input window, operand 6, single buffered']
    #allocation5 [shape = 's32[1]{0}', space=sflag, size = 0x4, scoped, tag = 'scoped memory for tcr_head_forward.1']
    %12 = vsyncpa [#allocation3], 0
    %13 = vsyncpa [#allocation5], 0
    loop: start=0, step=1, limit=4
    $region2: #{tcr_head_forward.1} parent=1 // loop_pre_header
      _
    $region3: #{tcr_head_forward.1} parent=1 // loop_header
      %s15 = sphi 0, %s19
      %p16 = scmp.ge.s32.totalorder %s15, 4
      %s25 = sphi 0, %s27
      %s28 = sphi 0, %s25
      %s29 = sphi 0, %s28
      %s45 = sphi 0, %s29
      %s51 = sphi 0, %s53
      %s54 = sphi 0, %s51
      %s55 = sphi 0, %s54
      %s71 = sphi 0, %s55
      %s77 = sphi 0, %s79
      %s80 = sphi 0, %s77
      %s81 = sphi 0, %s80
      %s97 = sphi 0, %s81
      %s101 = sphi 0, %s101
      %s103 = sphi 0, %s101
      %s104 = sphi 0, %s103
      %s118 = sphi 0, %s104
      %s122 = sphi 0, %s122
      %s124 = sphi 0, %s122
      %s125 = sphi 0, %s124
      %s139 = sphi 0, %s125
      %s143 = sphi 0, %s143
      %s145 = sphi 0, %s143
      %s146 = sphi 0, %s145
      %s160 = sphi 0, %s146
      %s164 = sphi 0, %s164
      %s166 = sphi 0, %s164
      %s167 = sphi 0, %s166
      %s181 = sphi 0, %s167
      %s187 = sphi 0, %s189
      %s190 = sphi 0, %s187
      %s191 = sphi 0, %s190
      %s207 = sphi 0, %s191
    $region4: #{tcr_head_forward.1} parent=1 // loop_header_branch
      %18 = sbr.rel (%p16) target = $region8
    $region5: #{tcr_head_forward.1} parent=1 // loop_body
      %s20 = ssub.s32 %s15, 1
      %s21 = ssub.s32 %s15, 2
      %s22 = sadd.s32 %s15, 1
      %s23 = ssub.s32 %s15, %s22
      %p24 = scmp.eq.s32.totalorder %s23, 0
      %s26 = sadd.s32 %s25, 1
      %s27 = scalar_select %p24, %s25, %s26
      %p30 = pneg %p24
      %p31 = scmp.eq.s32.totalorder %s15, 1
      %p32 = por %p30, %p31
      %p33 = scmp.ne.s32.totalorder %s25, %s28
      %p34 = scmp.eq.s32.totalorder %s15, 0
      %p35 = por %p33, %p34
      %p36 = scmp.ne.s32.totalorder %s25, %s28
      %p37 = scmp.eq.s32.totalorder %s20, 1
      %p38 = por %p36, %p37
      %p39 = scmp.ne.s32.totalorder %s28, %s29
      %p40 = scmp.eq.s32.totalorder %s20, 0
      %p41 = por %p39, %p40
      %p42 = scmp.ne.s32.totalorder %s28, %s29
      %p43 = scmp.eq.s32.totalorder %s21, 1
      %p44 = por %p42, %p43
      %p46 = scmp.ne.s32.totalorder %s29, %s45
      %p47 = scmp.eq.s32.totalorder %s21, 0
      %p48 = por %p46, %p47
      %s49 = ssub.s32 %s15, %s22
      %p50 = scmp.eq.s32.totalorder %s49, 0
      %s52 = sadd.s32 %s51, 1
      %s53 = scalar_select %p50, %s51, %s52
      %p56 = pneg %p50
      %p57 = scmp.eq.s32.totalorder %s15, 1
      %p58 = por %p56, %p57
      %p59 = scmp.ne.s32.totalorder %s51, %s54
      %p60 = scmp.eq.s32.totalorder %s15, 0
      %p61 = por %p59, %p60
      %p62 = scmp.ne.s32.totalorder %s51, %s54
      %p63 = scmp.eq.s32.totalorder %s20, 1
      %p64 = por %p62, %p63
      %p65 = scmp.ne.s32.totalorder %s54, %s55
      %p66 = scmp.eq.s32.totalorder %s20, 0
      %p67 = por %p65, %p66
      %p68 = scmp.ne.s32.totalorder %s54, %s55
      %p69 = scmp.eq.s32.totalorder %s21, 1
      %p70 = por %p68, %p69
      %p72 = scmp.ne.s32.totalorder %s55, %s71
      %p73 = scmp.eq.s32.totalorder %s21, 0
      %p74 = por %p72, %p73
      %s75 = ssub.s32 %s15, %s22
      %p76 = scmp.eq.s32.totalorder %s75, 0
      %s78 = sadd.s32 %s77, 1
      %s79 = scalar_select %p76, %s77, %s78
      %p82 = pneg %p76
      %p83 = scmp.eq.s32.totalorder %s15, 1
      %p84 = por %p82, %p83
      %p85 = scmp.ne.s32.totalorder %s77, %s80
      %p86 = scmp.eq.s32.totalorder %s15, 0
      %p87 = por %p85, %p86
      %p88 = scmp.ne.s32.totalorder %s77, %s80
      %p89 = scmp.eq.s32.totalorder %s20, 1
      %p90 = por %p88, %p89
      %p91 = scmp.ne.s32.totalorder %s80, %s81
      %p92 = scmp.eq.s32.totalorder %s20, 0
      %p93 = por %p91, %p92
      %p94 = scmp.ne.s32.totalorder %s80, %s81
      %p95 = scmp.eq.s32.totalorder %s21, 1
      %p96 = por %p94, %p95
      %p98 = scmp.ne.s32.totalorder %s81, %s97
      %p99 = scmp.eq.s32.totalorder %s21, 0
      %p100 = por %p98, %p99
      %s102 = sadd.s32 %s101, 1
      %p105 = scmp.eq.s32.totalorder %s15, 1
      %p106 = scmp.ne.s32.totalorder %s101, %s103
      %p107 = scmp.eq.s32.totalorder %s15, 0
      %p108 = por %p106, %p107
      %p109 = scmp.ne.s32.totalorder %s101, %s103
      %p110 = scmp.eq.s32.totalorder %s20, 1
      %p111 = por %p109, %p110
      %p112 = scmp.ne.s32.totalorder %s103, %s104
      %p113 = scmp.eq.s32.totalorder %s20, 0
      %p114 = por %p112, %p113
      %p115 = scmp.ne.s32.totalorder %s103, %s104
      %p116 = scmp.eq.s32.totalorder %s21, 1
      %p117 = por %p115, %p116
      %p119 = scmp.ne.s32.totalorder %s104, %s118
      %p120 = scmp.eq.s32.totalorder %s21, 0
      %p121 = por %p119, %p120
      %s123 = sadd.s32 %s122, 1
      %p126 = scmp.eq.s32.totalorder %s15, 1
      %p127 = scmp.ne.s32.totalorder %s122, %s124
      %p128 = scmp.eq.s32.totalorder %s15, 0
      %p129 = por %p127, %p128
      %p130 = scmp.ne.s32.totalorder %s122, %s124
      %p131 = scmp.eq.s32.totalorder %s20, 1
      %p132 = por %p130, %p131
      %p133 = scmp.ne.s32.totalorder %s124, %s125
      %p134 = scmp.eq.s32.totalorder %s20, 0
      %p135 = por %p133, %p134
      %p136 = scmp.ne.s32.totalorder %s124, %s125
      %p137 = scmp.eq.s32.totalorder %s21, 1
      %p138 = por %p136, %p137
      %p140 = scmp.ne.s32.totalorder %s125, %s139
      %p141 = scmp.eq.s32.totalorder %s21, 0
      %p142 = por %p140, %p141
      %s144 = sadd.s32 %s143, 1
      %p147 = scmp.eq.s32.totalorder %s15, 1
      %p148 = scmp.ne.s32.totalorder %s143, %s145
      %p149 = scmp.eq.s32.totalorder %s15, 0
      %p150 = por %p148, %p149
      %p151 = scmp.ne.s32.totalorder %s143, %s145
      %p152 = scmp.eq.s32.totalorder %s20, 1
      %p153 = por %p151, %p152
      %p154 = scmp.ne.s32.totalorder %s145, %s146
      %p155 = scmp.eq.s32.totalorder %s20, 0
      %p156 = por %p154, %p155
      %p157 = scmp.ne.s32.totalorder %s145, %s146
      %p158 = scmp.eq.s32.totalorder %s21, 1
      %p159 = por %p157, %p158
      %p161 = scmp.ne.s32.totalorder %s146, %s160
      %p162 = scmp.eq.s32.totalorder %s21, 0
      %p163 = por %p161, %p162
      %s165 = sadd.s32 %s164, 1
      %p168 = scmp.eq.s32.totalorder %s15, 1
      %p169 = scmp.ne.s32.totalorder %s164, %s166
      %p170 = scmp.eq.s32.totalorder %s15, 0
      %p171 = por %p169, %p170
      %p172 = scmp.ne.s32.totalorder %s164, %s166
      %p173 = scmp.eq.s32.totalorder %s20, 1
      %p174 = por %p172, %p173
      %p175 = scmp.ne.s32.totalorder %s166, %s167
      %p176 = scmp.eq.s32.totalorder %s20, 0
      %p177 = por %p175, %p176
      %p178 = scmp.ne.s32.totalorder %s166, %s167
      %p179 = scmp.eq.s32.totalorder %s21, 1
      %p180 = por %p178, %p179
      %p182 = scmp.ne.s32.totalorder %s167, %s181
      %p183 = scmp.eq.s32.totalorder %s21, 0
      %p184 = por %p182, %p183
      %s185 = ssub.s32 %s15, %s22
      %p186 = scmp.eq.s32.totalorder %s185, 0
      %s188 = sadd.s32 %s187, 1
      %s189 = scalar_select %p186, %s187, %s188
      %p192 = pneg %p186
      %p193 = scmp.eq.s32.totalorder %s15, 1
      %p194 = por %p192, %p193
      %p195 = scmp.ne.s32.totalorder %s187, %s190
      %p196 = scmp.eq.s32.totalorder %s15, 0
      %p197 = por %p195, %p196
      %p198 = scmp.ne.s32.totalorder %s187, %s190
      %p199 = scmp.eq.s32.totalorder %s20, 1
      %p200 = por %p198, %p199
      %p201 = scmp.ne.s32.totalorder %s190, %s191
      %p202 = scmp.eq.s32.totalorder %s20, 0
      %p203 = por %p201, %p202
      %p204 = scmp.ne.s32.totalorder %s190, %s191
      %p205 = scmp.eq.s32.totalorder %s21, 1
      %p206 = por %p204, %p205
      %p208 = scmp.ne.s32.totalorder %s191, %s207
      %p209 = scmp.eq.s32.totalorder %s21, 0
      %p210 = por %p208, %p209
      %p211 = scmp.le.s32.totalorder 1, %s15
      %p212 = scmp.lt.s32.totalorder %s15, 3
      %p213 = pnand %p211, %p212
      %p214 = pneg %p213
      // Predicated region
      $region9: #{tcr_head_forward.1} parent=5 // pred_check
        _
      $region10: #{tcr_head_forward.1} parent=5 // pred_check_branch
        %216 = sbr.rel (%p213) target = $region12
      $region11: #{tcr_head_forward.1} parent=5 // pred_region
        %s217 = ssub.s32 %s15, 1
        // Predicated region
        $region13: #{tcr_head_forward.1} parent=11 // pred_check
          %p218 = pneg %p114
        $region14: #{tcr_head_forward.1} parent=11 // pred_check_branch
          %220 = sbr.rel (%p218) target = $region16
        $region15: #{tcr_head_forward.1} parent=11 // pred_region
          _
        $region16: #{tcr_head_forward.1} parent=11 // pred_fallthru
          _
        // Predicated region
        $region17: #{tcr_head_forward.1} parent=11 // pred_check
          %p221 = pneg %p135
        $region18: #{tcr_head_forward.1} parent=11 // pred_check_branch
          %223 = sbr.rel (%p221) target = $region20
        $region19: #{tcr_head_forward.1} parent=11 // pred_region
          _
        $region20: #{tcr_head_forward.1} parent=11 // pred_fallthru
          _
        // Predicated region
        $region21: #{tcr_head_forward.1} parent=11 // pred_check
          %p224 = pneg %p156
        $region22: #{tcr_head_forward.1} parent=11 // pred_check_branch
          %226 = sbr.rel (%p224) target = $region24
        $region23: #{tcr_head_forward.1} parent=11 // pred_region
          %s228 = ssub.s32 16, 16
          %229 = vsyncadd [#allocation3], %s228
          %s231 = sshll.u32 %s5, 4
          %s232 = int_to_ptr.vmem [resolvable:$true] %s231
          %234 = dma.vmem_to_smem %s232, 16, [#allocation2], [#allocation3]
        $region24: #{tcr_head_forward.1} parent=11 // pred_fallthru
          _
        // Predicated region
        $region25: #{tcr_head_forward.1} parent=11 // pred_check
          %p235 = pneg %p177
        $region26: #{tcr_head_forward.1} parent=11 // pred_check_branch
          %237 = sbr.rel (%p235) target = $region28
        $region27: #{tcr_head_forward.1} parent=11 // pred_region
          %s239 = ssub.s32 16, 16
          %240 = vsyncadd [#allocation5], %s239
          %s242 = sshll.u32 %s6, 4
          %s243 = int_to_ptr.vmem [resolvable:$true] %s242
          %245 = dma.vmem_to_smem %s243, 16, [#allocation4], [#allocation5]
        $region28: #{tcr_head_forward.1} parent=11 // pred_fallthru
          _
      $region12: #{tcr_head_forward.1} parent=5 // pred_fallthru
        _
      %p246 = scmp.lt.s32.totalorder %s15, 2
      // Predicated region
      $region29: #{tcr_head_forward.1} parent=5 // pred_check
        %p247 = pneg %p246
      $region30: #{tcr_head_forward.1} parent=5 // pred_check_branch
        %249 = sbr.rel (%p247) target = $region32
      $region31: #{tcr_head_forward.1} parent=5 // pred_region
        // Predicated region
        $region33: #{tcr_head_forward.1} parent=31 // pred_check
          %p250 = pneg %p35
        $region34: #{tcr_head_forward.1} parent=31 // pred_check_branch
          %252 = sbr.rel (%p250) target = $region36
        $region35: #{tcr_head_forward.1} parent=31 // pred_region
          %p253 = scmp.lt.s32.totalorder %s15, 1
          %s254 = scalar_select %p253, %s15, 1
          %s255 = scalar_lea.vmem %s0, %s254
        $region36: #{tcr_head_forward.1} parent=31 // pred_fallthru
          _
        // Predicated region
        $region37: #{tcr_head_forward.1} parent=31 // pred_check
          %p256 = pneg %p61
        $region38: #{tcr_head_forward.1} parent=31 // pred_check_branch
          %258 = sbr.rel (%p256) target = $region40
        $region39: #{tcr_head_forward.1} parent=31 // pred_region
          %p259 = scmp.lt.s32.totalorder %s15, 1
          %s260 = scalar_select %p259, %s15, 1
          %s261 = scalar_lea.vmem %s1, %s260
        $region40: #{tcr_head_forward.1} parent=31 // pred_fallthru
          _
        // Predicated region
        $region41: #{tcr_head_forward.1} parent=31 // pred_check
          %p262 = pneg %p87
        $region42: #{tcr_head_forward.1} parent=31 // pred_check_branch
          %264 = sbr.rel (%p262) target = $region44
        $region43: #{tcr_head_forward.1} parent=31 // pred_region
          %p265 = scmp.lt.s32.totalorder %s15, 1
          %s266 = scalar_select %p265, %s15, 1
          %s267 = smul.addr %s266, 8
          %s268 = scalar_lea.vmem %s2, %s267
        $region44: #{tcr_head_forward.1} parent=31 // pred_fallthru
          _
      $region32: #{tcr_head_forward.1} parent=5 // pred_fallthru
        _
      %p269 = scmp.le.s32.totalorder 1, %s15
      %p270 = scmp.lt.s32.totalorder %s15, 3
      %p271 = pnand %p269, %p270
      %p272 = pneg %p271
      // Predicated region
      $region45: #{tcr_head_forward.1} parent=5 // pred_check
        _
      $region46: #{tcr_head_forward.1} parent=5 // pred_check_branch
        %274 = sbr.rel (%p271) target = $region48
      $region47: #{tcr_head_forward.1} parent=5 // pred_region
        %s275 = ssub.s32 %s15, 1
        // Predicated region
        $region49: #{tcr_head_forward.1} parent=47 // pred_check
          %p276 = pneg %p156
        $region50: #{tcr_head_forward.1} parent=47 // pred_check_branch
          %278 = sbr.rel (%p276) target = $region52
        $region51: #{tcr_head_forward.1} parent=47 // pred_region
          %279 = dma.done [#allocation3], 16
        $region52: #{tcr_head_forward.1} parent=47 // pred_fallthru
          _
        // Predicated region
        $region53: #{tcr_head_forward.1} parent=47 // pred_check
          %p280 = pneg %p177
        $region54: #{tcr_head_forward.1} parent=47 // pred_check_branch
          %282 = sbr.rel (%p280) target = $region56
        $region55: #{tcr_head_forward.1} parent=47 // pred_region
          %283 = dma.done [#allocation5], 16
        $region56: #{tcr_head_forward.1} parent=47 // pred_fallthru
          _
        %284 = sfence
        %p285 = scmp.lt.s32.totalorder %s20, 1
        %s286 = scalar_select %p285, %s20, 1
        %s287 = scalar_lea.vmem %s0, %s286
        %p288 = pneg %p41
        %p289 = pneg %p38
        %p290 = scmp.lt.s32.totalorder %s20, 1
        %s291 = scalar_select %p290, %s20, 1
        %s292 = scalar_lea.vmem %s1, %s291
        %p293 = pneg %p67
        %p294 = pneg %p64
        %p295 = scmp.lt.s32.totalorder %s20, 1
        %s296 = scalar_select %p295, %s20, 1
        %s297 = smul.addr %s296, 8
        %s298 = scalar_lea.vmem %s2, %s297
        %p299 = pneg %p93
        %p300 = pneg %p90
        %p301 = pneg %p114
        %p302 = pneg %p111
        %p303 = pneg %p135
        %p304 = pneg %p132
        %p305 = pneg %p156
        %p306 = pneg %p153
        %p307 = pneg %p177
        %p308 = pneg %p174
        %p309 = pneg %p203
        %p310 = pneg %p200
        %p311 = scmp.lt.s32.totalorder %s20, 1
        %s312 = scalar_select %p311, %s20, 1
        %s313 = scalar_lea.vmem %s7, %s312
        %p314 = scmp.lt.s32.totalorder %s20, 1
        %s315 = scalar_select %p314, %s20, 1
        %s316 = scalar_lea.vmem %s0, %s315
        %p317 = scmp.lt.s32.totalorder %s20, 1
        %s318 = scalar_select %p317, %s20, 1
        %s319 = scalar_lea.vmem %s1, %s318
        %p320 = scmp.lt.s32.totalorder %s20, 1
        %s321 = scalar_select %p320, %s20, 1
        %s322 = smul.addr %s321, 8
        %s323 = scalar_lea.vmem %s2, %s322
        %p324 = scmp.lt.s32.totalorder %s20, 1
        %s325 = scalar_select %p324, %s20, 1
        %s326 = scalar_lea.vmem %s7, %s325
        %v328 = vld [vmem:[%s3] sm:$0xf]
        %v329 = vld [vmem:[%s3 + $0x4] sm:$0xf]
        %v330 = vld [vmem:[%s3 + $0x8] sm:$0xf]
        %v331 = vld [vmem:[%s3 + $0xc] sm:$0xf]
        %v332 = vld [vmem:[%s4] sm:$0x1]
        %s333 = sld [smem:[#allocation2]]
        %s334 = sld [smem:[#allocation2 + $0x1]]
        %s335 = sld [smem:[#allocation4]]
        %s336 = sld [smem:[#allocation4 + $0x1]]
        %v337 = vld [vmem:[%s316] sm:$0x1]
        %v338 = vcvt.s32.f32 %v337
        %v339 = vld [vmem:[%s319] sm:$0x1]
        %v340 = vcvt.s32.f32 %v339
        %341 = vxpose.xlu0.b32.start [1/16] %v338, 128
        %342 = vxpose.xlu0.b32.cont [2/16] 0.0, 128
        %343 = vxpose.xlu0.b32.cont [3/16] 0.0, 128
        %344 = vxpose.xlu0.b32.cont [4/16] 0.0, 128
        %345 = vxpose.xlu0.b32.cont [5/16] 0.0, 128
        %346 = vxpose.xlu0.b32.cont [6/16] 0.0, 128
        %347 = vxpose.xlu0.b32.cont [7/16] 0.0, 128
        %348 = vxpose.xlu0.b32.cont [8/16] 0.0, 128
        %349 = vxpose.xlu0.b32.cont [9/16] 0.0, 128
        %350 = vxpose.xlu0.b32.cont [10/16] 0.0, 128
        %351 = vxpose.xlu0.b32.cont [11/16] 0.0, 128
        %352 = vxpose.xlu0.b32.cont [12/16] 0.0, 128
        %353 = vxpose.xlu0.b32.cont [13/16] 0.0, 128
        %354 = vxpose.xlu0.b32.cont [14/16] 0.0, 128
        %355 = vxpose.xlu0.b32.cont [15/16] 0.0, 128
        %356 = vxpose.xlu0.b32.end [16/16] 0.0, 128
        %v357 = vpop.trf.xlu0
        %v358 = vpop.trf.xlu0
        %v359 = vpop.trf.xlu0
        %v360 = vpop.trf.xlu0
        %v361 = vpop.trf.xlu0
        %v362 = vpop.trf.xlu0
        %v363 = vpop.trf.xlu0
        %v364 = vpop.trf.xlu0
        %v365 = vpop.trf.xlu0
        %v366 = vpop.trf.xlu0
        %v367 = vpop.trf.xlu0
        %v368 = vpop.trf.xlu0
        %v369 = vpop.trf.xlu0
        %v370 = vpop.trf.xlu0
        %v371 = vpop.trf.xlu0
        %v372 = vpop.trf.xlu0
        %374 = vset.pattern.permute.xlu0 0
        %375 = vperm.xlu0 %374, %v357
        %v376 = vpop.permute.xlu0 %375
        %v379 = vlaneseq
        %v380 = vshrl.u32 %v379, 7
        %v381 = vsub.s32 0, %v380
        %v382 = vrot.slane %v338, %v381
        %vm384 = vcmp.eq.f32.partialorder %v376, %v382
        %v385 = vsel %vm384, 1, 0
        %v386 = vcvt.s32.f32 %v385
        %v387 = vpack.c.bf16 %v386, %v386
        %v388 = vld [vmem:[%s323] sm:$0xff]
        %v389 = vpack.c.bf16 %v388, %v388
        %vm390 = vcmask 64512
        %v392 = vsel %vm390, %v387, 0
        %vm394 = vcmask 1043456
        %v396 = vsel %vm394, %v389, 0
        %398 = vmatprep.subr.bf16.mxu0 0
        %399 = vmatpush1.bf16.msra.mxu0 %v396
        %400 = vmatprep.subr.bf16.mxu0 0
        %401 = vmatpush1.bf16.msra.mxu0 0
        %402 = vmatprep.subr.bf16.mxu0 0
        %403 = vmatpush1.bf16.msra.mxu0 0
        %404 = vmatprep.subr.bf16.mxu0 0
        %405 = vmatpush1.bf16.msra.mxu0 0
        %406 = vmatprep.subr.bf16.mxu0 0
        %407 = vmatpush1.bf16.msra.mxu0 0
        %408 = vmatprep.subr.bf16.mxu0 0
        %409 = vmatpush1.bf16.msra.mxu0 0
        %410 = vmatprep.subr.bf16.mxu0 0
        %411 = vmatpush1.bf16.msra.mxu0 0
        %412 = vmatprep.subr.bf16.mxu0 0
        %413 = vmatpush1.bf16.msra.mxu0 0
        %414 = vmatprep.subr.bf16.mxu0 0
        %415 = vmatpush1.bf16.msra.mxu0 0
        %416 = vmatprep.subr.bf16.mxu0 0
        %417 = vmatpush1.bf16.msra.mxu0 0
        %418 = vmatprep.subr.bf16.mxu0 0
        %419 = vmatpush1.bf16.msra.mxu0 0
        %420 = vmatprep.subr.bf16.mxu0 0
        %421 = vmatpush1.bf16.msra.mxu0 0
        %422 = vmatprep.subr.bf16.mxu0 0
        %423 = vmatpush1.bf16.msra.mxu0 0
        %424 = vmatprep.subr.bf16.mxu0 0
        %425 = vmatpush1.bf16.msra.mxu0 0
        %426 = vmatprep.subr.bf16.mxu0 0
        %427 = vmatpush1.bf16.msra.mxu0 0
        %428 = vmatprep.subr.bf16.mxu0 0
        %429 = vmatpush1.bf16.msra.mxu0 0
        %430 = vmatprep.mubr.bf16.mxu0 0
        %431 = vmatmul.mubr.bf16.gmra.mrb[0].mxu0 %v392
        %v432 = vpop.f32.mrb[0].mxu0
        %v433 = vadd.f32 0.0, %v432
        %v434 = vpop.f32.mrb[0].mxu0
        %v435 = vpop.f32.mrb[0].mxu0
        %v436 = vpop.f32.mrb[0].mxu0
        %437 = vdwg.mxu0
        %v438 = vpack.c.bf16 %v433, %v433
        %v440 = vlaneseq
        %v441 = vshrl.u32 %v440, 7
        %v442 = vsub.s32 0, %v441
        %v443 = vrot.slane %v332, %v442
        %v449 = vunpack.c.l.b16 %v328
        %v450 = vunpack.c.l.b16 %v329
        %v451 = vunpack.c.l.b16 %v330
        %v452 = vunpack.c.l.b16 %v331
        %v453 = vpack.c.b16 %v450, %v449
        %v454 = vpack.c.b16 %v452, %v451
        %vm457 = vcmask 261120
        %v459 = vsel %vm457, %v438, 0
        %461 = vmatprep.subr.bf16.mxu0 0
        %462 = vmatpush1.bf16.msra.mxu0 %v453
        %463 = vmatprep.subr.bf16.mxu0 0
        %464 = vmatpush1.bf16.msra.mxu0 %v454
        %465 = vmatprep.subr.bf16.mxu0 0
        %466 = vmatpush1.bf16.msra.mxu0 0
        %467 = vmatprep.subr.bf16.mxu0 0
        %468 = vmatpush1.bf16.msra.mxu0 0
        %469 = vmatprep.subr.bf16.mxu0 0
        %470 = vmatpush1.bf16.msra.mxu0 0
        %471 = vmatprep.subr.bf16.mxu0 0
        %472 = vmatpush1.bf16.msra.mxu0 0
        %473 = vmatprep.subr.bf16.mxu0 0
        %474 = vmatpush1.bf16.msra.mxu0 0
        %475 = vmatprep.subr.bf16.mxu0 0
        %476 = vmatpush1.bf16.msra.mxu0 0
        %477 = vmatprep.subr.bf16.mxu0 0
        %478 = vmatpush1.bf16.msra.mxu0 0
        %479 = vmatprep.subr.bf16.mxu0 0
        %480 = vmatpush1.bf16.msra.mxu0 0
        %481 = vmatprep.subr.bf16.mxu0 0
        %482 = vmatpush1.bf16.msra.mxu0 0
        %483 = vmatprep.subr.bf16.mxu0 0
        %484 = vmatpush1.bf16.msra.mxu0 0
        %485 = vmatprep.subr.bf16.mxu0 0
        %486 = vmatpush1.bf16.msra.mxu0 0
        %487 = vmatprep.subr.bf16.mxu0 0
        %488 = vmatpush1.bf16.msra.mxu0 0
        %489 = vmatprep.subr.bf16.mxu0 0
        %490 = vmatpush1.bf16.msra.mxu0 0
        %491 = vmatprep.subr.bf16.mxu0 0
        %492 = vmatpush1.bf16.msra.mxu0 0
        %493 = vmatprep.mubr.bf16.mxu0 0
        %494 = vmatmul.mubr.bf16.gmra.mrb[0].mxu0 %v459
        %v495 = vpop.f32.mrb[0].mxu0
        %v496 = vadd.f32 %v443, %v495
        %v497 = vpop.f32.mrb[0].mxu0
        %v498 = vpop.f32.mrb[0].mxu0
        %v499 = vpop.f32.mrb[0].mxu0
        %500 = vdwg.mxu0
        %v501 = vmul.f32 %v496, 0.5
        %v502 = vmul.f32 %v496, 0.044715
        %v503 = vmul.f32 %v502, %v496
        %v504 = vmul.f32 %v503, %v496
        %v505 = vadd.f32 %v496, %v504
        %v506 = vmul.f32 %v505, 0.7978846
        %v507 = vtanh.pop %v506
        %v508 = vadd.f32 %v507, 1.0
        %v509 = vmul.f32 %v501, %v508
        %v510 = vpack.c.bf16 %v509, %v509
        %v512 = vsel %vm457, %v510, 0
        %514 = vmatprep.subr.bf16.mxu0 0
        %515 = vmatpush1.bf16.xpose.msra.mxu0 %v512
        %516 = vmatprep.subr.bf16.mxu0 0
        %517 = vmatpush1.bf16.xpose.msra.mxu0 0
        %518 = vmatprep.subr.bf16.mxu0 0
        %519 = vmatpush1.bf16.xpose.msra.mxu0 0
        %520 = vmatprep.subr.bf16.mxu0 0
        %521 = vmatpush1.bf16.xpose.msra.mxu0 0
        %522 = vmatprep.subr.bf16.mxu0 0
        %523 = vmatpush1.bf16.xpose.msra.mxu0 0
        %524 = vmatprep.subr.bf16.mxu0 0
        %525 = vmatpush1.bf16.xpose.msra.mxu0 0
        %526 = vmatprep.subr.bf16.mxu0 0
        %527 = vmatpush1.bf16.xpose.msra.mxu0 0
        %528 = vmatprep.subr.bf16.mxu0 0
        %529 = vmatpush1.bf16.xpose.msra.mxu0 0
        %530 = vmatprep.subr.bf16.mxu0 0
        %531 = vmatpush1.bf16.xpose.msra.mxu0 0
        %532 = vmatprep.subr.bf16.mxu0 0
        %533 = vmatpush1.bf16.xpose.msra.mxu0 0
        %534 = vmatprep.subr.bf16.mxu0 0
        %535 = vmatpush1.bf16.xpose.msra.mxu0 0
        %536 = vmatprep.subr.bf16.mxu0 0
        %537 = vmatpush1.bf16.xpose.msra.mxu0 0
        %538 = vmatprep.subr.bf16.mxu0 0
        %539 = vmatpush1.bf16.xpose.msra.mxu0 0
        %540 = vmatprep.subr.bf16.mxu0 0
        %541 = vmatpush1.bf16.xpose.msra.mxu0 0
        %542 = vmatprep.subr.bf16.mxu0 0
        %543 = vmatpush1.bf16.xpose.msra.mxu0 0
        %544 = vmatprep.subr.bf16.mxu0 0
        %545 = vmatpush1.bf16.xpose.msra.mxu0 0
        %546 = vmatprep.mubr.bf16.mxu0 0
        %547 = vmatmul.mubr.bf16.gmra.mrb[0].mxu0 %v512
        %v548 = vpop.f32.mrb[0].mxu0
        %v549 = vadd.f32 0.0, %v548
        %v550 = vpop.f32.mrb[0].mxu0
        %v551 = vpop.f32.mrb[0].mxu0
        %v552 = vpop.f32.mrb[0].mxu0
        %553 = vdwg.mxu0
        %v554 = vmul.f32 %v549, 0.5
        %v555 = vmul.f32 %v549, 0.044715
        %v556 = vmul.f32 %v555, %v549
        %v557 = vmul.f32 %v556, %v549
        %v558 = vadd.f32 %v549, %v557
        %v559 = vmul.f32 %v558, 0.7978846
        %v560 = vtanh.pop %v559
        %v561 = vadd.f32 %v560, 1.0
        %v562 = vmul.f32 %v554, %v561
        %vm563 = vcmp.lt.f32.partialorder %v340, 0.0
        %v564 = vsel %vm563, 1, 0
        %v565 = vcvt.s32.f32 %v564
        %v566 = vmul.f32 %v565, -100.0
        %v567 = vstv %s333
        %v568 = vmul.f32 %v562, %v567
        %v569 = vstv %s335
        %v570 = vadd.f32 %v568, %v569
        %v571 = vadd.f32 %v570, %v566
        %v572 = vstv %s334
        %v573 = vmul.f32 %v562, %v572
        %v574 = vstv %s336
        %v575 = vadd.f32 %v573, %v574
        %v576 = vadd.f32 %v575, %v566
        %v577 = vsub.f32 1.0, %v565
        %v578 = vmax.f32 %v571, %v576
        %v579 = vsub.f32 %v571, %v578
        %v580 = vmul.f32 %v579, 1.442695
        %v581 = vpow.pop %v580
        %v582 = vsub.f32 %v576, %v578
        %v583 = vmul.f32 %v582, 1.442695
        %v584 = vpow.pop %v583
        %v585 = vadd.f32 %v581, %v584
        %v586 = vlog2.pop %v585
        %v587 = vmul.f32 %v586, 0.6931472
        %v588 = vadd.f32 %v578, %v587
        %vm589 = vcmp.eq.f32.partialorder %v340, 1.0
        %v590 = vsel %vm589, %v576, %v571
        %v591 = vsub.f32 %v588, %v590
        %v592 = vmul.f32 %v591, %v577
        %vm593 = vcmp.gt.f32.partialorder %v576, %v571
        %v594 = vsel %vm593, 1.0, 0.0
        %vm595 = vcmp.eq.f32.partialorder %v594, %v340
        %v596 = vsel %vm595, 1, 0
        %v597 = vcvt.s32.f32 %v596
        %vm598 = vcmask 57344
        %v599 = vsel %vm598, %v592, 0.0
        %600 = vadd.xlane.f32.xlu0 %v599
        %v601 = vpop.xlane.xlu0 %600
        %v602 = vrot.slane %v601, 4
        %v603 = vadd.f32 %v601, %v602
        %v604 = vrot.slane %v603, 2
        %v605 = vadd.f32 %v603, %v604
        %v606 = vrot.slane %v605, 1
        %v607 = vadd.f32 %v605, %v606
        %s608 = vtos %v607
        %s609 = sadd.f32 %s608, 0.0
        %v610 = vsel %vm598, %v597, 0.0
        %611 = vadd.xlane.f32.xlu0 %v610
        %v612 = vpop.xlane.xlu0 %611
        %v613 = vrot.slane %v612, 4
        %v614 = vadd.f32 %v612, %v613
        %v615 = vrot.slane %v614, 2
        %v616 = vadd.f32 %v614, %v615
        %v617 = vrot.slane %v616, 1
        %v618 = vadd.f32 %v616, %v617
        %s619 = vtos %v618
        %s620 = sadd.f32 %s619, 0.0
        %v621 = vsel %vm598, %v577, 0.0
        %622 = vadd.xlane.f32.xlu0 %v621
        %v623 = vpop.xlane.xlu0 %622
        %v624 = vrot.slane %v623, 4
        %v625 = vadd.f32 %v623, %v624
        %v626 = vrot.slane %v625, 2
        %v627 = vadd.f32 %v625, %v626
        %v628 = vrot.slane %v627, 1
        %v629 = vadd.f32 %v627, %v628
        %s630 = vtos %v629
        %s631 = sadd.f32 %s630, 0.0
        %v632 = vlaneseq
        %v633 = vand.u32 %v632, 127
        %vm634 = vcmp.eq.s32.totalorder %v633, 0
        %v635 = vstv %s609
        %v636 = vsel %vm634, %v635, 0.0
        %vm637 = vcmp.eq.s32.totalorder %v633, 1
        %v638 = vstv %s620
        %v639 = vsel %vm637, %v638, 0.0
        %v640 = vadd.f32 %v636, %v639
        %vm641 = vcmp.eq.s32.totalorder %v633, 2
        %v642 = vstv %s631
        %v643 = vsel %vm641, %v642, 0.0
        %v644 = vadd.f32 %v640, %v643
        %645 = vst [vmem:[%s326] sm:$0x1] %v644
        %p646 = scmp.lt.s32.totalorder %s20, 1
        %s647 = scalar_select %p646, %s20, 1
        %s648 = scalar_lea.vmem %s7, %s647
        // Predicated region
        $region57: #{tcr_head_forward.1} parent=47 // pred_check
          %p649 = pneg %p200
        $region58: #{tcr_head_forward.1} parent=47 // pred_check_branch
          %651 = sbr.rel (%p649) target = $region60
        $region59: #{tcr_head_forward.1} parent=47 // pred_region
          _
        $region60: #{tcr_head_forward.1} parent=47 // pred_fallthru
          _
      $region48: #{tcr_head_forward.1} parent=5 // pred_fallthru
        _
      %p652 = scmp.le.s32.totalorder 2, %s15
      // Predicated region
      $region61: #{tcr_head_forward.1} parent=5 // pred_check
        %p653 = pneg %p652
      $region62: #{tcr_head_forward.1} parent=5 // pred_check_branch
        %655 = sbr.rel (%p653) target = $region64
      $region63: #{tcr_head_forward.1} parent=5 // pred_region
        %s656 = ssub.s32 %s15, 2
        // Predicated region
        $region65: #{tcr_head_forward.1} parent=63 // pred_check
          %p657 = pneg %p206
        $region66: #{tcr_head_forward.1} parent=63 // pred_check_branch
          %659 = sbr.rel (%p657) target = $region68
        $region67: #{tcr_head_forward.1} parent=63 // pred_region
          %p660 = scmp.lt.s32.totalorder %s21, 1
          %s661 = scalar_select %p660, %s21, 1
          %s662 = scalar_lea.vmem %s7, %s661
        $region68: #{tcr_head_forward.1} parent=63 // pred_fallthru
          _
      $region64: #{tcr_head_forward.1} parent=5 // pred_fallthru
        _
    $region6: #{tcr_head_forward.1} parent=1 // loop_footer
      %s19 = sadd.s32 1, %s15
    $region7: #{tcr_head_forward.1} parent=1 // loop_footer_branch
      %14 = sbr.rel target = $region3
    $region8: #{tcr_head_forward.1} parent=1 // loop_exit
      _
    %663 = vsyncpa [#allocation3], 1
    %s664 = scalar_lea.sflag [#allocation3], 1
    %665 = vsyncpa %s664, 1
    %666 = vsyncpa [#allocation5], 1

</llo_original>
